<compile_context>
chip_gen: v5e
topology: v5e:2x2
jax: 0.10.0
libtpu: 0.0.40
codegen_flags: <defaults>
</compile_context>

<pallas_src>
import functools
import math

import jax
import jax.numpy as jnp
from jax import lax
from jax.experimental import pallas as pl
from jax.experimental.pallas import tpu as pltpu


def _hash_router_kernel(bounds_ref, idx_ref, cw_ref, onepos_ref, zeropos_ref,
                        carry_ref, triu_ref, *, capacity: int, seq_len: int):
    E, TS = cw_ref.shape
    b = pl.program_id(0)

    @pl.when(b == 0)
    def _init():
        carry_ref[...] = jnp.zeros_like(carry_ref)
        onepos_ref[...] = jnp.zeros_like(onepos_ref)
        zeropos_ref[...] = jnp.zeros_like(zeropos_ref)
        row_i = lax.broadcasted_iota(jnp.int32, (TS, TS), 0)
        col_i = lax.broadcasted_iota(jnp.int32, (TS, TS), 1)
        triu_ref[...] = (row_i <= col_i).astype(jnp.bfloat16)   # triu[i, j] = i <= j

    t0 = b * TS
    idx = idx_ref[...]                                          # (1, TS) int32, -1 = padding
    e_iota = lax.broadcasted_iota(jnp.int32, (E, TS), 0)
    mask = idx == e_iota                                        # (E, TS) one-hot, lane-dense

    # Inclusive within-block cumsum along tokens on the MXU: (E,TS) @ triu(TS,TS)
    # gives a lane-dense result directly in the working layout (exact for 0/1).
    cum_local = jnp.dot(mask.astype(jnp.bfloat16), triu_ref[...],
                        preferred_element_type=jnp.float32).astype(jnp.int32)

    carry1 = carry_ref[...]                                     # (E,1) ones before this block
    cum1 = carry1 + cum_local                                   # (E,TS) global inclusive count
    blk_tot = jnp.sum(mask.astype(jnp.int32), axis=1, keepdims=True)
    carry_ref[...] = carry1 + blk_tot                           # carry for the next block

    # Capacity dropping == topk + scatter_ + multiply in the PyTorch module:
    # a routed token survives iff it is among the first `capacity` tokens of
    # its expert (token-index tie-break).
    cw_ref[...] = jnp.logical_and(mask, cum1 <= capacity).astype(jnp.float32)

    # ---- position tables for top_idx (all int32) ---------------------------
    t_glob = t0 + lax.broadcasted_iota(jnp.int32, (1, TS), 1)   # global token index
    valid = t_glob < seq_len
    tgb1 = jnp.broadcast_to(t_glob + 1, (E, TS))                # hoisted: token index + 1
    tcnt = jnp.minimum(t_glob + 1, seq_len)                     # valid tokens <= t
    cum0 = tcnt - cum1                                          # non-routed (zero) count
    is_zero = jnp.logical_and(jnp.logical_not(mask), valid)

    # Rank windows actually touched by this block, precomputed in the wrapper
    # and read as SMEM scalars (scalar prefetch): ~TS/E ones ranks and at most
    # ~TS zeros ranks per block, 0 once the tables are full -- instead of a
    # fixed `capacity` trip count.
    lo1 = bounds_ref[4 * b + 0]
    hi1 = bounds_ref[4 * b + 1]
    lo0 = bounds_ref[4 * b + 2]
    hi0 = bounds_ref[4 * b + 3]

    def _scatter(pos_ref, sel_mask, cum, lo, hi):
        # pos_ref[r, e] = index of the token whose 0-based rank for expert e is
        # r.  Ranks are unique per (r, e): each cell is written by exactly one
        # masked store across the whole grid (no read-modify-write chain).
        def body(r, carry):
            sel = jnp.logical_and(sel_mask, cum == r + 1)        # (E, TS), lane-dense
            p1 = jnp.sum(jnp.where(sel, tgb1, 0), axis=1,
                         keepdims=True).reshape(1, E)            # token idx + 1; 0 = no hit
            pltpu.store(pos_ref.at[pl.ds(r, 1), :], p1 - 1, mask=p1 > 0)
            return carry
        lax.fori_loop(lo, hi, body, 0)

    _scatter(onepos_ref, mask, cum1, lo1, hi1)
    _scatter(zeropos_ref, is_zero, cum0, lo0, hi0)


def hash_router_forward(input_ids, hash_bin_map, num_experts, capacity_factor,
                        min_capacity, *, block_tokens=1024):
    """Pallas implementation of HashRouter.forward (training-mode capacity)."""
    S = int(input_ids.shape[0])
    E = int(num_experts)

    capacity = int(math.ceil(S / E * float(capacity_factor)))
    capacity = max(capacity, int(min_capacity))
    if capacity > S:
        # torch.topk(k, dim=0) raises for k > len(input_ids); mirror that.
        raise ValueError(f"capacity ({capacity}) exceeds sequence length ({S})")

    # Token tile: lane multiple, large enough to amortise the ~0.35us grid-step
    # overhead, capped so the (TS,TS) bf16 triu scratch stays <= 8 MiB (v7x).
    TS = min(max(128, (int(block_tokens) // 128) * 128), 2048)
    S_pad = ((S + TS - 1) // TS) * TS
    nblocks = S_pad // TS
    cap_pad = ((capacity + 7) // 8) * 8

    # Hash-map gather stays outside the kernel (cheap HBM gather); only the
    # (S,) int32 expert index enters the kernel (no (S,V) one-hot anywhere).
    # NOTE: out-of-range token ids are clipped by jnp.take (torch would error).
    indices1_s = jnp.take(hash_bin_map.astype(jnp.int32),
                          input_ids.astype(jnp.int32))
    idx_pad = jnp.pad(indices1_s, (0, S_pad - S), constant_values=-1)
    idx2d = idx_pad.reshape(1, S_pad)                           # tokens on lanes

    # Tiny O(S*E) XLA pass: per-block per-expert counts -> per-block rank
    # windows for the in-kernel scatter loops (scalar-prefetch pattern).
    blk_mask = (idx_pad.reshape(nblocks, TS, 1)
                == jnp.arange(E, dtype=jnp.int32)[None, None, :])
    blk_counts = jnp.sum(blk_mask, axis=1, dtype=jnp.int32)     # (nblocks, E)
    carry_after = jnp.cumsum(blk_counts, axis=0, dtype=jnp.int32)
    carry_before = carry_after - blk_counts
    n_e = carry_after[-1]                                       # (E,) tokens per expert

    t0 = jnp.arange(nblocks, dtype=jnp.int32) * TS
    t1v = jnp.minimum(t0 + TS, S)
    lo1 = jnp.min(carry_before, axis=1)
    hi1 = jnp.minimum(jnp.max(carry_after, axis=1), capacity)
    lo0 = t0 - jnp.max(carry_before, axis=1)
    hi0 = jnp.minimum(t1v - jnp.min(carry_after, axis=1), capacity)
    bounds = jnp.stack([lo1, hi1, lo0, hi0], axis=1).astype(jnp.int32).reshape(-1)

    kernel = functools.partial(_hash_router_kernel,
                               capacity=capacity, seq_len=S)

    cw_es, onepos, zeropos = pl.pallas_call(
        kernel,
        out_shape=(
            jax.ShapeDtypeStruct((E, S_pad), jnp.float32),
            jax.ShapeDtypeStruct((cap_pad, E), jnp.int32),
            jax.ShapeDtypeStruct((cap_pad, E), jnp.int32),
        ),
        grid_spec=pltpu.PrefetchScalarGridSpec(
            num_scalar_prefetch=1,
            grid=(nblocks,),
            in_specs=[pl.BlockSpec((1, TS), lambda b, bnd: (0, b))],
            out_specs=[
                pl.BlockSpec((E, TS), lambda b, bnd: (0, b)),
                pl.BlockSpec((cap_pad, E), lambda b, bnd: (0, 0)),   # resident tables
                pl.BlockSpec((cap_pad, E), lambda b, bnd: (0, 0)),
            ],
            scratch_shapes=[
                pltpu.VMEM((E, 1), jnp.int32),          # running per-expert ones count
                pltpu.VMEM((TS, TS), jnp.bfloat16),     # within-block triu (built once)
            ],
        ),
        # Sequential carry + shared rank tables -> "arbitrary" grid axis.
        compiler_params=pltpu.CompilerParams(
            dimension_semantics=("arbitrary",)),
    )(bounds, idx2d)

    combine_weights = cw_es.T[:S]                               # (S, E) float32

    # Tiny O(capacity*E) epilogue left to XLA: merge the ones/zeros position
    # tables into top_idx (ones first, then earliest non-routed tokens) and
    # compute chosen_num = sum_e min(n_e, capacity) / S.
    n_row = n_e.reshape(1, E)
    r = jnp.arange(capacity, dtype=jnp.int32)[:, None]
    zsel = jnp.clip(r - n_row, 0, cap_pad - 1)
    zero_part = jnp.take_along_axis(zeropos, zsel, axis=0)
    top_idx = jnp.where(r < n_row, onepos[:capacity], zero_part)

    chosen = jnp.sum(jnp.minimum(n_e, capacity).astype(jnp.float32)) / float(S)
    gate_info = {"chosen_num": chosen}
    return combine_weights, gate_info, top_idx


def _reference_forward(input_ids, hash_bin_map, num_experts, capacity):
    """Pure-JAX reference with the same (index-order tie-break) semantics."""
    idx = hash_bin_map[input_ids]
    mask1 = jax.nn.one_hot(idx, num_experts, dtype=jnp.float32)
    cum = jnp.cumsum(mask1, axis=0)
    capped = mask1 * (cum <= capacity).astype(jnp.float32)
    chosen = jnp.sum(capped) / input_ids.shape[0]
    order = jnp.argsort(-mask1, axis=0, stable=True)[:capacity]  # ones first, index order
    return capped, chosen, order.astype(jnp.int32)


def _run_and_check(seq_len, num_experts, voc_size, capacity_factor,
                   min_capacity, block_tokens, seed):
    key = jax.random.PRNGKey(seed)
    k_map, k_ids = jax.random.split(key)
    hash_bin_map = jax.random.randint(k_map, (voc_size,), 0, num_experts,
                                      dtype=jnp.int32)
    input_ids = jax.random.randint(k_ids, (seq_len,), 0, voc_size,
                                   dtype=jnp.int32)

    combine_weights, gate_info, top_idx = hash_router_forward(
        input_ids, hash_bin_map, num_experts, capacity_factor, min_capacity,
        block_tokens=block_tokens)
    jax.block_until_ready((combine_weights, gate_info["chosen_num"], top_idx))

    capacity = max(int(math.ceil(seq_len / num_experts * capacity_factor)),
                   int(min_capacity))
    ref_cw, ref_chosen, ref_top = _reference_forward(
        input_ids, hash_bin_map, num_experts, capacity)

    assert combine_weights.shape == (seq_len, num_experts)
    assert top_idx.shape == (capacity, num_experts)
    assert jnp.allclose(combine_weights, ref_cw), "combine_weights mismatch"
    assert jnp.allclose(gate_info["chosen_num"], ref_chosen), "chosen_num mismatch"
    assert jnp.array_equal(top_idx, ref_top), "top_idx mismatch"


if __name__ == "__main__":
    # Small single-block case (capacity == min_capacity, heavy lane padding).
    _run_and_check(seq_len=16, num_experts=8, voc_size=128,
                   capacity_factor=1.0, min_capacity=2,
                   block_tokens=128, seed=0)
    # Multi-block case: exercises the running carry, the dynamically bounded
    # scatter windows crossing block boundaries, and the padded tail.
    _run_and_check(seq_len=300, num_experts=4, voc_size=64,
                   capacity_factor=1.5, min_capacity=4,
                   block_tokens=128, seed=0)
    print("KERNEL_OK")
</pallas_src>

<mosaic_0001>
module attributes {stable_mosaic.version = 11 : i64} {
  func.func @_hash_router_kernel(%arg0: i32, %arg1: memref<4xi32, #tpu.memory_space<smem>>, %arg2: memref<1x128xi32, #tpu.memory_space<vmem>>, %arg3: memref<8x128xf32, #tpu.memory_space<vmem>>, %arg4: memref<8x8xi32, #tpu.memory_space<vmem>>, %arg5: memref<8x8xi32, #tpu.memory_space<vmem>>, %arg6: memref<8x1xi32, #tpu.memory_space<vmem>>, %arg7: memref<128x128xbf16, #tpu.memory_space<vmem>>) attributes {dimension_semantics = [#tpu.dimension_semantics<arbitrary>], iteration_bounds = array<i64: 1>, scalar_prefetch = 1 : i64, scratch_operands = 2 : i64, tpu.core_type = #tpu.core_type<tc>, window_params = [{transform_indices = @transform_0, window_bounds = array<i64: 1, 128>}, {transform_indices = @transform_1, window_bounds = array<i64: 8, 128>}, {pipeline_mode = #tpu.pipeline_mode<synchronous>, transform_indices = @transform_2, window_bounds = array<i64: 8, 8>}, {pipeline_mode = #tpu.pipeline_mode<synchronous>, transform_indices = @transform_3, window_bounds = array<i64: 8, 8>}]} {
    %c0_i32 = arith.constant 0 : i32
    %0 = arith.cmpi eq, %arg0, %c0_i32 : i32
    %1 = arith.extui %0 : i1 to i32
    %c0_i32_0 = arith.constant 0 : i32
    %2 = arith.cmpi ne, %1, %c0_i32_0 : i32
    scf.if %2 {
      %c0_i32_24 = arith.constant 0 : i32
      %66 = vector.broadcast %c0_i32_24 : i32 to vector<8x1xi32>
      %c0_25 = arith.constant 0 : index
      %c0_26 = arith.constant 0 : index
      %67 = vector.load %arg6[%c0_25, %c0_26] : memref<8x1xi32, #tpu.memory_space<vmem>>, vector<8x1xi32>
      tpu.vector_store %arg6[%c0_25, %c0_26], %66 {strides = array<i32>} : memref<8x1xi32, #tpu.memory_space<vmem>>, vector<8x1xi32>,
      %c0_i32_27 = arith.constant 0 : i32
      %68 = vector.broadcast %c0_i32_27 : i32 to vector<8x8xi32>
      %c0_28 = arith.constant 0 : index
      %c0_29 = arith.constant 0 : index
      %69 = vector.load %arg4[%c0_28, %c0_29] : memref<8x8xi32, #tpu.memory_space<vmem>>, vector<8x8xi32>
      tpu.vector_store %arg4[%c0_28, %c0_29], %68 {strides = array<i32>} : memref<8x8xi32, #tpu.memory_space<vmem>>, vector<8x8xi32>,
      %c0_i32_30 = arith.constant 0 : i32
      %70 = vector.broadcast %c0_i32_30 : i32 to vector<8x8xi32>
      %c0_31 = arith.constant 0 : index
      %c0_32 = arith.constant 0 : index
      %71 = vector.load %arg5[%c0_31, %c0_32] : memref<8x8xi32, #tpu.memory_space<vmem>>, vector<8x8xi32>
      tpu.vector_store %arg5[%c0_31, %c0_32], %70 {strides = array<i32>} : memref<8x8xi32, #tpu.memory_space<vmem>>, vector<8x8xi32>,
      %72 = tpu.iota {dimensions = array<i32: 0>} : vector<128x128xi32>
      %73 = tpu.iota {dimensions = array<i32: 1>} : vector<128x128xi32>
      %74 = arith.cmpi sle, %72, %73 : vector<128x128xi32>
      %75 = arith.extui %74 : vector<128x128xi1> to vector<128x128xi32>
      %76 = arith.sitofp %75 : vector<128x128xi32> to vector<128x128xf32>
      %77 = arith.truncf %76 : vector<128x128xf32> to vector<128x128xbf16>
      %c0_33 = arith.constant 0 : index
      %c0_34 = arith.constant 0 : index
      %78 = vector.load %arg7[%c0_33, %c0_34] : memref<128x128xbf16, #tpu.memory_space<vmem>>, vector<128x128xbf16>
      tpu.vector_store %arg7[%c0_33, %c0_34], %77 {strides = array<i32>} : memref<128x128xbf16, #tpu.memory_space<vmem>>, vector<128x128xbf16>,
    } else {
    }
    %c128_i32 = arith.constant 128 : i32
    %3 = arith.muli %arg0, %c128_i32 : i32
    %c0 = arith.constant 0 : index
    %c0_1 = arith.constant 0 : index
    %4 = vector.load %arg2[%c0, %c0_1] : memref<1x128xi32, #tpu.memory_space<vmem>>, vector<1x128xi32>
    %5 = tpu.iota {dimensions = array<i32: 0>} : vector<8x128xi32>
    %6 = vector.broadcast %4 : vector<1x128xi32> to vector<8x128xi32>
    %7 = arith.cmpi eq, %6, %5 : vector<8x128xi32>
    %8 = arith.extui %7 : vector<8x128xi1> to vector<8x128xi32>
    %9 = arith.sitofp %8 : vector<8x128xi32> to vector<8x128xf32>
    %10 = arith.truncf %9 : vector<8x128xf32> to vector<8x128xbf16>
    %c0_2 = arith.constant 0 : index
    %c0_3 = arith.constant 0 : index
    %11 = vector.load %arg7[%c0_2, %c0_3] : memref<128x128xbf16, #tpu.memory_space<vmem>>, vector<128x128xbf16>
    %cst = arith.constant dense<0.000000e+00> : vector<8x128xf32>
    %12 = tpu.matmul %10, %11, %cst {dimension_numbers = #tpu.dot_dimension_numbers<[1], [0], [0], [1], [0, 0, 1, 1], [], []>} : vector<8x128xbf16>, vector<128x128xbf16>, vector<8x128xf32> -> vector<8x128xf32>
    %13 = arith.fptosi %12 : vector<8x128xf32> to vector<8x128xi32>
    %c0_4 = arith.constant 0 : index
    %c0_5 = arith.constant 0 : index
    %14 = vector.load %arg6[%c0_4, %c0_5] : memref<8x1xi32, #tpu.memory_space<vmem>>, vector<8x1xi32>
    %15 = vector.broadcast %14 : vector<8x1xi32> to vector<8x128xi32>
    %16 = arith.addi %15, %13 : vector<8x128xi32>
    %17 = arith.extui %7 : vector<8x128xi1> to vector<8x128xi32>
    %cst_6 = arith.constant dense<0> : vector<8xi32>
    %18 = vector.multi_reduction <add>, %17, %cst_6 [1] : vector<8x128xi32> to vector<8xi32>
    %19 = vector.shape_cast %18 : vector<8xi32> to vector<8x1xi32>
    %20 = arith.addi %14, %19 : vector<8x1xi32>
    %c0_7 = arith.constant 0 : index
    %c0_8 = arith.constant 0 : index
    %21 = vector.load %arg6[%c0_7, %c0_8] : memref<8x1xi32, #tpu.memory_space<vmem>>, vector<8x1xi32>
    tpu.vector_store %arg6[%c0_7, %c0_8], %20 {strides = array<i32>} : memref<8x1xi32, #tpu.memory_space<vmem>>, vector<8x1xi32>,
    %c2_i32 = arith.constant 2 : i32
    %22 = vector.broadcast %c2_i32 : i32 to vector<8x128xi32>
    %23 = arith.cmpi sle, %16, %22 : vector<8x128xi32>
    %24 = arith.andi %7, %23 : vector<8x128xi1>
    %25 = arith.extui %24 : vector<8x128xi1> to vector<8x128xi32>
    %26 = arith.sitofp %25 : vector<8x128xi32> to vector<8x128xf32>
    %c0_9 = arith.constant 0 : index
    %c0_10 = arith.constant 0 : index
    %27 = vector.load %arg3[%c0_9, %c0_10] : memref<8x128xf32, #tpu.memory_space<vmem>>, vector<8x128xf32>
    tpu.vector_store %arg3[%c0_9, %c0_10], %26 {strides = array<i32>} : memref<8x128xf32, #tpu.memory_space<vmem>>, vector<8x128xf32>,
    %28 = tpu.iota {dimensions = array<i32: 1>} : vector<1x128xi32>
    %29 = vector.broadcast %3 : i32 to vector<1x128xi32>
    %30 = arith.addi %29, %28 : vector<1x128xi32>
    %c16_i32 = arith.constant 16 : i32
    %31 = vector.broadcast %c16_i32 : i32 to vector<1x128xi32>
    %32 = arith.cmpi slt, %30, %31 : vector<1x128xi32>
    %c1_i32 = arith.constant 1 : i32
    %33 = vector.broadcast %c1_i32 : i32 to vector<1x128xi32>
    %34 = arith.addi %30, %33 : vector<1x128xi32>
    %35 = vector.shape_cast %34 : vector<1x128xi32> to vector<1x128xi32>
    %36 = vector.broadcast %35 : vector<1x128xi32> to vector<8x128xi32>
    %c1_i32_11 = arith.constant 1 : i32
    %37 = vector.broadcast %c1_i32_11 : i32 to vector<1x128xi32>
    %38 = arith.addi %30, %37 : vector<1x128xi32>
    %c16_i32_12 = arith.constant 16 : i32
    %39 = vector.broadcast %c16_i32_12 : i32 to vector<1x128xi32>
    %40 = arith.minsi %38, %39 : vector<1x128xi32>
    %41 = vector.broadcast %40 : vector<1x128xi32> to vector<8x128xi32>
    %42 = arith.subi %41, %16 : vector<8x128xi32>
    %cst_13 = arith.constant dense<true> : vector<8x128xi1>
    %43 = arith.xori %7, %cst_13 : vector<8x128xi1>
    %44 = vector.broadcast %32 : vector<1x128xi1> to vector<8x128xi1>
    %45 = arith.andi %43, %44 : vector<8x128xi1>
    %c4_i32 = arith.constant 4 : i32
    %46 = arith.muli %c4_i32, %arg0 : i32
    %c0_i32_14 = arith.constant 0 : i32
    %47 = arith.addi %46, %c0_i32_14 : i32
    %48 = arith.index_cast %47 : i32 to index
    %49 = memref.load %arg1[%48] : memref<4xi32, #tpu.memory_space<smem>>
    %c4_i32_15 = arith.constant 4 : i32
    %50 = arith.muli %c4_i32_15, %arg0 : i32
    %c1_i32_16 = arith.constant 1 : i32
    %51 = arith.addi %50, %c1_i32_16 : i32
    %52 = arith.index_cast %51 : i32 to index
    %53 = memref.load %arg1[%52] : memref<4xi32, #tpu.memory_space<smem>>
    %c4_i32_17 = arith.constant 4 : i32
    %54 = arith.muli %c4_i32_17, %arg0 : i32
    %c2_i32_18 = arith.constant 2 : i32
    %55 = arith.addi %54, %c2_i32_18 : i32
    %56 = arith.index_cast %55 : i32 to index
    %57 = memref.load %arg1[%56] : memref<4xi32, #tpu.memory_space<smem>>
    %c4_i32_19 = arith.constant 4 : i32
    %58 = arith.muli %c4_i32_19, %arg0 : i32
    %c3_i32 = arith.constant 3 : i32
    %59 = arith.addi %58, %c3_i32 : i32
    %60 = arith.index_cast %59 : i32 to index
    %61 = memref.load %arg1[%60] : memref<4xi32, #tpu.memory_space<smem>>
    %c0_i32_20 = arith.constant 0 : i32
    %62 = arith.subi %53, %49 : i32
    %63 = arith.addi %49, %62 : i32
    %c1_i32_21 = arith.constant 1 : i32
    scf.for %arg8 = %49 to %63 step %c1_i32_21  : i32 {
      %c1_i32_24 = arith.constant 1 : i32
      %66 = arith.addi %arg8, %c1_i32_24 : i32
      %67 = vector.broadcast %66 : i32 to vector<8x128xi32>
      %68 = arith.cmpi eq, %16, %67 : vector<8x128xi32>
      %69 = arith.andi %7, %68 : vector<8x128xi1>
      %c0_i32_25 = arith.constant 0 : i32
      %70 = vector.broadcast %c0_i32_25 : i32 to vector<8x128xi32>
      %71 = arith.select %69, %36, %70 : vector<8x128xi1>, vector<8x128xi32>
      %cst_26 = arith.constant dense<0> : vector<8xi32>
      %72 = vector.multi_reduction <add>, %71, %cst_26 [1] : vector<8x128xi32> to vector<8xi32>
      %73 = vector.shape_cast %72 : vector<8xi32> to vector<8x1xi32>
      %74 = vector.shape_cast %73 : vector<8x1xi32> to vector<1x8xi32>
      %c1_i32_27 = arith.constant 1 : i32
      %75 = vector.broadcast %c1_i32_27 : i32 to vector<1x8xi32>
      %76 = arith.subi %74, %75 : vector<1x8xi32>
      %c0_i32_28 = arith.constant 0 : i32
      %77 = vector.broadcast %c0_i32_28 : i32 to vector<1x8xi32>
      %78 = arith.cmpi sgt, %74, %77 : vector<1x8xi32>
      %79 = arith.index_cast %arg8 : i32 to index
      %c0_29 = arith.constant 0 : index
      %80 = vector.load %arg4[%79, %c0_29] : memref<8x8xi32, #tpu.memory_space<vmem>>, vector<1x8xi32>
      tpu.vector_store %arg4[%79, %c0_29], %76 masked %78 {strides = array<i32>} : memref<8x8xi32, #tpu.memory_space<vmem>>, vector<1x8xi32>, vector<1x8xi1>
    }
    %c0_i32_22 = arith.constant 0 : i32
    %64 = arith.subi %61, %57 : i32
    %65 = arith.addi %57, %64 : i32
    %c1_i32_23 = arith.constant 1 : i32
    scf.for %arg8 = %57 to %65 step %c1_i32_23  : i32 {
      %c1_i32_24 = arith.constant 1 : i32
      %66 = arith.addi %arg8, %c1_i32_24 : i32
      %67 = vector.broadcast %66 : i32 to vector<8x128xi32>
      %68 = arith.cmpi eq, %42, %67 : vector<8x128xi32>
      %69 = arith.andi %45, %68 : vector<8x128xi1>
      %c0_i32_25 = arith.constant 0 : i32
      %70 = vector.broadcast %c0_i32_25 : i32 to vector<8x128xi32>
      %71 = arith.select %69, %36, %70 : vector<8x128xi1>, vector<8x128xi32>
      %cst_26 = arith.constant dense<0> : vector<8xi32>
      %72 = vector.multi_reduction <add>, %71, %cst_26 [1] : vector<8x128xi32> to vector<8xi32>
      %73 = vector.shape_cast %72 : vector<8xi32> to vector<8x1xi32>
      %74 = vector.shape_cast %73 : vector<8x1xi32> to vector<1x8xi32>
      %c1_i32_27 = arith.constant 1 : i32
      %75 = vector.broadcast %c1_i32_27 : i32 to vector<1x8xi32>
      %76 = arith.subi %74, %75 : vector<1x8xi32>
      %c0_i32_28 = arith.constant 0 : i32
      %77 = vector.broadcast %c0_i32_28 : i32 to vector<1x8xi32>
      %78 = arith.cmpi sgt, %74, %77 : vector<1x8xi32>
      %79 = arith.index_cast %arg8 : i32 to index
      %c0_29 = arith.constant 0 : index
      %80 = vector.load %arg5[%79, %c0_29] : memref<8x8xi32, #tpu.memory_space<vmem>>, vector<1x8xi32>
      tpu.vector_store %arg5[%79, %c0_29], %76 masked %78 {strides = array<i32>} : memref<8x8xi32, #tpu.memory_space<vmem>>, vector<1x8xi32>, vector<1x8xi1>
    }
    return
  }
  func.func @transform_0(%arg0: i32, %arg1: memref<4xi32, #tpu.memory_space<smem>>) -> (i32, i32) {
    %c0_i32 = arith.constant 0 : i32
    %c0_i32_0 = arith.constant 0 : i32
    return %c0_i32, %arg0 : i32, i32
  }
  func.func @transform_1(%arg0: i32, %arg1: memref<4xi32, #tpu.memory_space<smem>>) -> (i32, i32) {
    %c0_i32 = arith.constant 0 : i32
    %c0_i32_0 = arith.constant 0 : i32
    return %c0_i32, %arg0 : i32, i32
  }
  func.func @transform_2(%arg0: i32, %arg1: memref<4xi32, #tpu.memory_space<smem>>) -> (i32, i32) {
    %c0_i32 = arith.constant 0 : i32
    %c0_i32_0 = arith.constant 0 : i32
    %c0_i32_1 = arith.constant 0 : i32
    return %c0_i32, %c0_i32_0 : i32, i32
  }
  func.func @transform_3(%arg0: i32, %arg1: memref<4xi32, #tpu.memory_space<smem>>) -> (i32, i32) {
    %c0_i32 = arith.constant 0 : i32
    %c0_i32_0 = arith.constant 0 : i32
    %c0_i32_1 = arith.constant 0 : i32
    return %c0_i32, %c0_i32_0 : i32, i32
  }
}

</mosaic_0001>

<llo_original>
// kernel: tpu_custom_call.1
$region0: #{tpu_custom_call.1}
  #allocation0 [shape = 'u32[]', space=smem, size = 0x4, offset = 0x4, fixed_abs, tag = 'smem constant byte address 0x4 - core index']
  #allocation1 [shape = 'u32[72,128]{1,0:T(1,128)}', space=vmem, size = 0x9000, scoped, tag = 'internal scratch']
  #allocation2 [shape = 's32[8,1]{1,0:T(8,128)}', space=vmem, size = 0x1000, scoped, tag = 'scratch operand']
  #allocation3 [shape = 'bf16[128,128]{1,0:T(8,128)(2,1)}', space=vmem, size = 0x8000, scoped, tag = 'scratch operand']
  #allocation4 [shape = 's32[1]{0}', space=sflag, size = 0x4, scoped, tag = 'scoped memory for tpu_custom_call.1']
  #allocation5 [shape = 'u8[512]{0}', space=smem, size = 0x200, scoped, tag = 'prefetched SMEM operand 0']
  %s0 = inlined_call_operand.hbm [shape: s32[4], index: 0, kind: input, shape index: {}]
  %s1 = inlined_call_operand.hbm [shape: s32[1,128], index: 1, kind: input, shape index: {}]
  %s2 = inlined_call_operand.hbm [shape: f32[8,128], index: 2, kind: output, shape index: {0}]
  %s3 = inlined_call_operand.hbm [shape: s32[8,8], index: 3, kind: output, shape index: {1}]
  %s4 = inlined_call_operand.hbm [shape: s32[8,8], index: 4, kind: output, shape index: {2}]
  %5 = xla_tuple %s2, %s3, %s4
  %s6 = sld [smem:[#allocation0]]
  $region52: #{tpu_custom_call.1} parent=0
    _
  %s8 = ssub.s32 1, %s6
  %s9 = scalar_select 0, %s8, %s6
  %s11 = sshll.u32 %s0, 4
  %s12 = int_to_ptr.hbm [resolvable:$true] %s11
  %14 = dma.hbm_to_smem %s12, 16, [#allocation5], [#allocation4]
  %16 = dma.done [#allocation4], 16
  %17 = sfence
  $region1: #{tpu_custom_call.1} parent=0
    #allocation6 [shape = 'u8[512]{0}', space=vmem, size = 0x400, scoped, tag = 'input window, operand 1, single buffered']
    #allocation7 [shape = 's32[1]{0}', space=sflag, size = 0x4, scoped, tag = 'scoped memory for tpu_custom_call.1']
    #allocation8 [shape = 's32[1]{0}', space=sflag, size = 0x4, scoped, tag = 'scoped memory for tpu_custom_call.1']
    #allocation9 [shape = 'u8[4096]{0}', space=vmem, size = 0x1000, scoped, tag = 'output window, operand 0, single buffered']
    #allocation10 [shape = 'u8[4096]{0}', space=vmem, size = 0x1000, scoped, tag = 'output window, operand 1, single buffered']
    #allocation11 [shape = 's32[1]{0}', space=sflag, size = 0x4, scoped, tag = 'scoped memory for tpu_custom_call.1']
    #allocation12 [shape = 'u8[4096]{0}', space=vmem, size = 0x1000, scoped, tag = 'output window, operand 2, single buffered']
    %18 = vsyncpa [#allocation7], 0
    %19 = vsyncpa [#allocation8], 0
    %20 = vsyncpa [#allocation11], 0
    // Predicated region
    $region2: #{tpu_custom_call.1} parent=1 // pred_check
      _
    $region3: #{tpu_custom_call.1} parent=1 // pred_check_branch
      %22 = sbr.rel (0) target = $region5
    $region4: #{tpu_custom_call.1} parent=1 // pred_region
      %24 = vsyncadd [#allocation7], 0
      %s26 = sshll.u32 %s1, 4
      %s27 = int_to_ptr.hbm [resolvable:$true] %s26
      %s28 = sshll.u32 [#allocation6], 4
      %s29 = int_to_ptr.vmem [resolvable:$true] %s28
      %31 = dma.hbm_to_vmem [thread:$0]  %s27, 16, %s29, [#allocation7]
    $region5: #{tpu_custom_call.1} parent=1 // pred_fallthru
      _
    // Predicated region
    $region6: #{tpu_custom_call.1} parent=1 // pred_check
      _
    $region7: #{tpu_custom_call.1} parent=1 // pred_check_branch
      %33 = sbr.rel (0) target = $region9
    $region8: #{tpu_custom_call.1} parent=1 // pred_region
      %35 = dma.done [#allocation7], 16
    $region9: #{tpu_custom_call.1} parent=1 // pred_fallthru
      _
    %p36 = scmp.eq.s32.totalorder 0, 0
    // Predicated region
    $region10: #{tpu_custom_call.1} parent=1 // pred_check
      %p37 = pneg %p36
    $region11: #{tpu_custom_call.1} parent=1 // pred_check_branch
      %39 = sbr.rel (%p37) target = $region13
    $region12: #{tpu_custom_call.1} parent=1 // pred_region
      %vm40 = vcmask 7168
      %41 = vst.msk [vmem:[#allocation2] sm:$0xff] %vm40, 0
      %vm42 = vcmask 64512
      %43 = vst.msk [vmem:[#allocation10] sm:$0xff] %vm42, 0
      %44 = vst.msk [vmem:[#allocation12] sm:$0xff] %vm42, 0
      %v45 = vlaneseq
      %v46 = vshrl.u32 %v45, 7
      %v47 = vadd.s32 %v46, 8
      %v48 = vadd.s32 %v46, 16
      %v49 = vadd.s32 %v46, 24
      %v50 = vadd.s32 %v46, 32
      %v51 = vadd.s32 %v46, 40
      %v52 = vadd.s32 %v46, 48
      %v53 = vadd.s32 %v46, 56
      %v54 = vadd.s32 %v46, 64
      %v55 = vadd.s32 %v46, 72
      %v56 = vadd.s32 %v46, 80
      %v57 = vadd.s32 %v46, 88
      %v58 = vadd.s32 %v46, 96
      %v59 = vadd.s32 %v46, 104
      %v60 = vadd.s32 %v46, 112
      %v61 = vadd.s32 %v46, 120
      %v62 = vlaneseq
      %v63 = vand.u32 %v62, 127
      %vm64 = vcmp.le.s32.totalorder %v46, %v63
      %vm65 = vcmp.le.s32.totalorder %v47, %v63
      %vm66 = vcmp.le.s32.totalorder %v48, %v63
      %vm67 = vcmp.le.s32.totalorder %v49, %v63
      %vm68 = vcmp.le.s32.totalorder %v50, %v63
      %vm69 = vcmp.le.s32.totalorder %v51, %v63
      %vm70 = vcmp.le.s32.totalorder %v52, %v63
      %vm71 = vcmp.le.s32.totalorder %v53, %v63
      %vm72 = vcmp.le.s32.totalorder %v54, %v63
      %vm73 = vcmp.le.s32.totalorder %v55, %v63
      %vm74 = vcmp.le.s32.totalorder %v56, %v63
      %vm75 = vcmp.le.s32.totalorder %v57, %v63
      %vm76 = vcmp.le.s32.totalorder %v58, %v63
      %vm77 = vcmp.le.s32.totalorder %v59, %v63
      %vm78 = vcmp.le.s32.totalorder %v60, %v63
      %vm79 = vcmp.le.s32.totalorder %v61, %v63
      %v80 = vsel %vm64, 1, 0
      %v81 = vsel %vm65, 1, 0
      %v82 = vsel %vm66, 1, 0
      %v83 = vsel %vm67, 1, 0
      %v84 = vsel %vm68, 1, 0
      %v85 = vsel %vm69, 1, 0
      %v86 = vsel %vm70, 1, 0
      %v87 = vsel %vm71, 1, 0
      %v88 = vsel %vm72, 1, 0
      %v89 = vsel %vm73, 1, 0
      %v90 = vsel %vm74, 1, 0
      %v91 = vsel %vm75, 1, 0
      %v92 = vsel %vm76, 1, 0
      %v93 = vsel %vm77, 1, 0
      %v94 = vsel %vm78, 1, 0
      %v95 = vsel %vm79, 1, 0
      %v96 = vcvt.s32.f32 %v80
      %v97 = vcvt.s32.f32 %v81
      %v98 = vcvt.s32.f32 %v82
      %v99 = vcvt.s32.f32 %v83
      %v100 = vcvt.s32.f32 %v84
      %v101 = vcvt.s32.f32 %v85
      %v102 = vcvt.s32.f32 %v86
      %v103 = vcvt.s32.f32 %v87
      %v104 = vcvt.s32.f32 %v88
      %v105 = vcvt.s32.f32 %v89
      %v106 = vcvt.s32.f32 %v90
      %v107 = vcvt.s32.f32 %v91
      %v108 = vcvt.s32.f32 %v92
      %v109 = vcvt.s32.f32 %v93
      %v110 = vcvt.s32.f32 %v94
      %v111 = vcvt.s32.f32 %v95
      %v112 = vpack.c.bf16 %v96, %v96
      %v113 = vpack.c.bf16 %v97, %v97
      %v114 = vpack.c.bf16 %v98, %v98
      %v115 = vpack.c.bf16 %v99, %v99
      %v116 = vpack.c.bf16 %v100, %v100
      %v117 = vpack.c.bf16 %v101, %v101
      %v118 = vpack.c.bf16 %v102, %v102
      %v119 = vpack.c.bf16 %v103, %v103
      %v120 = vpack.c.bf16 %v104, %v104
      %v121 = vpack.c.bf16 %v105, %v105
      %v122 = vpack.c.bf16 %v106, %v106
      %v123 = vpack.c.bf16 %v107, %v107
      %v124 = vpack.c.bf16 %v108, %v108
      %v125 = vpack.c.bf16 %v109, %v109
      %v126 = vpack.c.bf16 %v110, %v110
      %v127 = vpack.c.bf16 %v111, %v111
      %128 = vst [vmem:[#allocation3] sm:$0xf] %v112
      %129 = vst [vmem:[#allocation3 + $0x4] sm:$0xf] %v113
      %130 = vst [vmem:[#allocation3 + $0x8] sm:$0xf] %v114
      %131 = vst [vmem:[#allocation3 + $0xc] sm:$0xf] %v115
      %132 = vst [vmem:[#allocation3 + $0x10] sm:$0xf] %v116
      %133 = vst [vmem:[#allocation3 + $0x14] sm:$0xf] %v117
      %134 = vst [vmem:[#allocation3 + $0x18] sm:$0xf] %v118
      %135 = vst [vmem:[#allocation3 + $0x1c] sm:$0xf] %v119
      %136 = vst [vmem:[#allocation3 + $0x20] sm:$0xf] %v120
      %137 = vst [vmem:[#allocation3 + $0x24] sm:$0xf] %v121
      %138 = vst [vmem:[#allocation3 + $0x28] sm:$0xf] %v122
      %139 = vst [vmem:[#allocation3 + $0x2c] sm:$0xf] %v123
      %140 = vst [vmem:[#allocation3 + $0x30] sm:$0xf] %v124
      %141 = vst [vmem:[#allocation3 + $0x34] sm:$0xf] %v125
      %142 = vst [vmem:[#allocation3 + $0x38] sm:$0xf] %v126
      %143 = vst [vmem:[#allocation3 + $0x3c] sm:$0xf] %v127
    $region13: #{tpu_custom_call.1} parent=1 // pred_fallthru
      _
    %s144 = smul.u32 0, 128
    %v145 = vld [vmem:[#allocation6] sm:$0x1]
    %v146 = vlaneseq
    %v147 = vshrl.u32 %v146, 7
    %v148 = vperm.slane %v145, 0
    %vm149 = vcmp.eq.s32.totalorder %v148, %v147
    %v150 = vsel %vm149, 1, 0
    %v151 = vcvt.s32.f32 %v150
    %v152 = vpack.c.bf16 %v151, %v151
    %v153 = vld [vmem:[#allocation3] sm:$0xf]
    %v154 = vld [vmem:[#allocation3 + $0x4] sm:$0xf]
    %v155 = vld [vmem:[#allocation3 + $0x8] sm:$0xf]
    %v156 = vld [vmem:[#allocation3 + $0xc] sm:$0xf]
    %v157 = vld [vmem:[#allocation3 + $0x10] sm:$0xf]
    %v158 = vld [vmem:[#allocation3 + $0x14] sm:$0xf]
    %v159 = vld [vmem:[#allocation3 + $0x18] sm:$0xf]
    %v160 = vld [vmem:[#allocation3 + $0x1c] sm:$0xf]
    %v161 = vld [vmem:[#allocation3 + $0x20] sm:$0xf]
    %v162 = vld [vmem:[#allocation3 + $0x24] sm:$0xf]
    %v163 = vld [vmem:[#allocation3 + $0x28] sm:$0xf]
    %v164 = vld [vmem:[#allocation3 + $0x2c] sm:$0xf]
    %v165 = vld [vmem:[#allocation3 + $0x30] sm:$0xf]
    %v166 = vld [vmem:[#allocation3 + $0x34] sm:$0xf]
    %v167 = vld [vmem:[#allocation3 + $0x38] sm:$0xf]
    %v168 = vld [vmem:[#allocation3 + $0x3c] sm:$0xf]
    %v185 = vunpack.c.l.b16 %v153
    %v186 = vunpack.c.l.b16 %v154
    %v187 = vunpack.c.l.b16 %v155
    %v188 = vunpack.c.l.b16 %v156
    %v189 = vunpack.c.l.b16 %v157
    %v190 = vunpack.c.l.b16 %v158
    %v191 = vunpack.c.l.b16 %v159
    %v192 = vunpack.c.l.b16 %v160
    %v193 = vunpack.c.l.b16 %v161
    %v194 = vunpack.c.l.b16 %v162
    %v195 = vunpack.c.l.b16 %v163
    %v196 = vunpack.c.l.b16 %v164
    %v197 = vunpack.c.l.b16 %v165
    %v198 = vunpack.c.l.b16 %v166
    %v199 = vunpack.c.l.b16 %v167
    %v200 = vunpack.c.l.b16 %v168
    %v201 = vpack.c.b16 %v186, %v185
    %v202 = vpack.c.b16 %v188, %v187
    %v203 = vpack.c.b16 %v190, %v189
    %v204 = vpack.c.b16 %v192, %v191
    %v205 = vpack.c.b16 %v194, %v193
    %v206 = vpack.c.b16 %v196, %v195
    %v207 = vpack.c.b16 %v198, %v197
    %v208 = vpack.c.b16 %v200, %v199
    %217 = vmatpush.bf16.msra.mxu0 %v208
    %218 = vmatpush.bf16.msra.mxu0 %v207
    %219 = vmatpush.bf16.msra.mxu0 %v206
    %220 = vmatpush.bf16.msra.mxu0 %v205
    %221 = vmatpush.bf16.msra.mxu0 %v204
    %222 = vmatpush.bf16.msra.mxu0 %v203
    %223 = vmatpush.bf16.msra.mxu0 %v202
    %224 = vmatpush.bf16.msra.mxu0 %v201
    %225 = vmatmul.bf16.gmra.mxu0 %v152
    %v226 = vpop.f32.mrf.mxu0
    %v227 = vadd.f32 0.0, %v226
    %v228 = vpop.f32.mrf.mxu0
    %229 = vdwg.mxu0
    %v230 = vcvt.f32.s32.to.zero.pseudo %v227
    %v231 = vld [vmem:[#allocation2] sm:$0xff]
    %232 = vset.pattern.permute.xlu0 0
    %233 = vperm.xlu0 %232, %v231
    %v234 = vpop.permute.xlu0 %233
    %v235 = vadd.s32 %v234, %v230
    %v236 = vand.u32 %v150, 65535
    %v237 = vshrl.u32 %v150, 16
    %v238 = vcvt.s32.f32 %v236
    %v239 = vcvt.s32.f32 %v237
    %240 = vadd.xlane.f32.xlu0 %v238
    %v241 = vpop.xlane.xlu0 %240
    %242 = vadd.xlane.f32.xlu0 %v239
    %v243 = vpop.xlane.xlu0 %242
    %v244 = vcvt.f32.s32 %v241
    %v245 = vcvt.f32.s32 %v243
    %v246 = vshll.u32 %v245, 16
    %v247 = vadd.s32 %v246, %v244
    %v248 = vadd.s32 %v231, %v247
    %vm249 = vcmask 7168
    %250 = vst.msk [vmem:[#allocation2] sm:$0xff] %vm249, %v248
    %vm251 = vcmp.le.s32.totalorder %v235, 2
    %vm252 = vmand %vm149, %vm251
    %v253 = vsel %vm252, 1, 0
    %v254 = vcvt.s32.f32 %v253
    %255 = vst [vmem:[#allocation9] sm:$0xff] %v254
    %v256 = vlaneseq
    %v257 = vand.u32 %v256, 127
    %v258 = vstv %s144
    %v259 = vadd.s32 %v258, %v257
    %vm260 = vcmp.lt.s32.totalorder %v259, 16
    %v261 = vadd.s32 %v259, 1
    %vm262 = vcmp.lt.s32.totalorder %v261, 16
    %v263 = vsel %vm262, %v261, 16
    %v264 = vsub.s32 %v263, %v235
    %vm265 = vmxor %vm149, 1
    %v266 = vsel %vm260, 1, 0
    %vm267 = vcmp.eq.s32.totalorder %v266, 1
    %vm268 = vmand %vm265, %vm267
    %s269 = smul.u32 0, 4
    %s270 = sld [smem:[#allocation5 + %s269]]
    %s271 = sadd.s32 %s269, 1
    %s272 = sld [smem:[#allocation5 + %s271]]
    %s273 = sadd.s32 %s269, 2
    %s274 = sld [smem:[#allocation5 + %s273]]
    %s275 = sadd.s32 %s269, 3
    %s276 = sld [smem:[#allocation5 + %s275]]
    // While loop
    $region14: #{tpu_custom_call.1} parent=1 // loop_pre_header
      _
    $region15: #{tpu_custom_call.1} parent=1 // loop_header
      %s278 = sphi %s270, %s280
      %p279 = scmp.ge.s32.totalorder %s278, %s272
    $region16: #{tpu_custom_call.1} parent=1 // loop_header_branch
      %282 = sbr.rel (%p279) target = $region20
    $region17: #{tpu_custom_call.1} parent=1 // loop_body
      %s283 = sadd.s32 %s278, 1
      %v284 = vstv %s283
      %vm285 = vcmp.eq.s32.totalorder %v235, %v284
      %vm286 = vmand %vm149, %vm285
      %v287 = vsel %vm286, %v261, 0
      %v288 = vand.u32 %v287, 65535
      %v289 = vshrl.u32 %v287, 16
      %v290 = vcvt.s32.f32 %v288
      %v291 = vcvt.s32.f32 %v289
      %292 = vadd.xlane.f32.xlu0 %v290
      %v293 = vpop.xlane.xlu0 %292
      %294 = vadd.xlane.f32.xlu0 %v291
      %v295 = vpop.xlane.xlu0 %294
      %v296 = vcvt.f32.s32 %v293
      %v297 = vcvt.f32.s32 %v295
      %v298 = vshll.u32 %v297, 16
      %v299 = vadd.s32 %v298, %v296
      %v300 = vsub.s32 %v299, 1
      %vm301 = vcmp.gt.s32.totalorder %v299, 0
      %v302 = vperm.slane %v300, %v257
      %v303 = vsel %vm301, 1, 0
      %v304 = vperm.slane %v303, %v257
      %vm305 = vcmp.ne.s32.totalorder %v304, 0
      %s306 = scalar_lea.vmem [#allocation10], %s278
      %vm307 = vcmask 57344
      %vm308 = vmand %vm307, %vm305
      %309 = vst.msk [vmem:[%s306] sm:$0x1] %vm308, %v302
    $region18: #{tpu_custom_call.1} parent=1 // loop_footer
      %s280 = sadd.s32 %s278, 1
    $region19: #{tpu_custom_call.1} parent=1 // loop_footer_branch
      %277 = sbr.rel target = $region15
    $region20: #{tpu_custom_call.1} parent=1 // loop_exit
      _
    // While loop
    $region21: #{tpu_custom_call.1} parent=1 // loop_pre_header
      _
    $region22: #{tpu_custom_call.1} parent=1 // loop_header
      %s311 = sphi %s274, %s313
      %p312 = scmp.ge.s32.totalorder %s311, %s276
    $region23: #{tpu_custom_call.1} parent=1 // loop_header_branch
      %315 = sbr.rel (%p312) target = $region27
    $region24: #{tpu_custom_call.1} parent=1 // loop_body
      %s316 = sadd.s32 %s311, 1
      %v317 = vstv %s316
      %vm318 = vcmp.eq.s32.totalorder %v264, %v317
      %vm319 = vmand %vm268, %vm318
      %v320 = vsel %vm319, %v261, 0
      %v321 = vand.u32 %v320, 65535
      %v322 = vshrl.u32 %v320, 16
      %v323 = vcvt.s32.f32 %v321
      %v324 = vcvt.s32.f32 %v322
      %325 = vadd.xlane.f32.xlu0 %v323
      %v326 = vpop.xlane.xlu0 %325
      %327 = vadd.xlane.f32.xlu0 %v324
      %v328 = vpop.xlane.xlu0 %327
      %v329 = vcvt.f32.s32 %v326
      %v330 = vcvt.f32.s32 %v328
      %v331 = vshll.u32 %v330, 16
      %v332 = vadd.s32 %v331, %v329
      %v333 = vsub.s32 %v332, 1
      %vm334 = vcmp.gt.s32.totalorder %v332, 0
      %v335 = vperm.slane %v333, %v257
      %v336 = vsel %vm334, 1, 0
      %v337 = vperm.slane %v336, %v257
      %vm338 = vcmp.ne.s32.totalorder %v337, 0
      %s339 = scalar_lea.vmem [#allocation12], %s311
      %vm340 = vcmask 57344
      %vm341 = vmand %vm340, %vm338
      %342 = vst.msk [vmem:[%s339] sm:$0x1] %vm341, %v335
    $region25: #{tpu_custom_call.1} parent=1 // loop_footer
      %s313 = sadd.s32 %s311, 1
    $region26: #{tpu_custom_call.1} parent=1 // loop_footer_branch
      %310 = sbr.rel target = $region22
    $region27: #{tpu_custom_call.1} parent=1 // loop_exit
      _
    // Predicated region
    $region28: #{tpu_custom_call.1} parent=1 // pred_check
      _
    $region29: #{tpu_custom_call.1} parent=1 // pred_check_branch
      %344 = sbr.rel (0) target = $region31
    $region30: #{tpu_custom_call.1} parent=1 // pred_region
      %346 = vsyncadd [#allocation8], 0
      %s348 = sshll.u32 [#allocation9], 4
      %s349 = int_to_ptr.vmem [resolvable:$true] %s348
      %s350 = sshll.u32 %s2, 4
      %s351 = int_to_ptr.hbm [resolvable:$true] %s350
      %353 = dma.vmem_to_hbm [thread:$0]  %s349, 128, %s351, [#allocation8]
    $region31: #{tpu_custom_call.1} parent=1 // pred_fallthru
      _
    // Predicated region
    $region32: #{tpu_custom_call.1} parent=1 // pred_check
      _
    $region33: #{tpu_custom_call.1} parent=1 // pred_check_branch
      %355 = sbr.rel (0) target = $region35
    $region34: #{tpu_custom_call.1} parent=1 // pred_region
      %357 = vsyncadd [#allocation11], 0
      %s359 = sshll.u32 [#allocation10], 4
      %s360 = int_to_ptr.vmem [resolvable:$true] %s359
      %s361 = sshll.u32 %s3, 4
      %s362 = int_to_ptr.hbm [resolvable:$true] %s361
      %364 = dma.vmem_to_hbm [thread:$0]  %s360, 128, %s362, [#allocation11]
    $region35: #{tpu_custom_call.1} parent=1 // pred_fallthru
      _
    // Predicated region
    $region36: #{tpu_custom_call.1} parent=1 // pred_check
      _
    $region37: #{tpu_custom_call.1} parent=1 // pred_check_branch
      %366 = sbr.rel (0) target = $region39
    $region38: #{tpu_custom_call.1} parent=1 // pred_region
      %368 = vsyncadd [#allocation11], 0
      %s370 = sshll.u32 [#allocation12], 4
      %s371 = int_to_ptr.vmem [resolvable:$true] %s370
      %s372 = sshll.u32 %s4, 4
      %s373 = int_to_ptr.hbm [resolvable:$true] %s372
      %375 = dma.vmem_to_hbm [thread:$0]  %s371, 128, %s373, [#allocation11]
    $region39: #{tpu_custom_call.1} parent=1 // pred_fallthru
      _
    // Predicated region
    $region40: #{tpu_custom_call.1} parent=1 // pred_check
      _
    $region41: #{tpu_custom_call.1} parent=1 // pred_check_branch
      %377 = sbr.rel (0) target = $region43
    $region42: #{tpu_custom_call.1} parent=1 // pred_region
      %379 = dma.done [#allocation8], 128
    $region43: #{tpu_custom_call.1} parent=1 // pred_fallthru
      _
    // Predicated region
    $region44: #{tpu_custom_call.1} parent=1 // pred_check
      _
    $region45: #{tpu_custom_call.1} parent=1 // pred_check_branch
      %381 = sbr.rel (0) target = $region47
    $region46: #{tpu_custom_call.1} parent=1 // pred_region
      %383 = dma.done [#allocation11], 128
    $region47: #{tpu_custom_call.1} parent=1 // pred_fallthru
      _
    // Predicated region
    $region48: #{tpu_custom_call.1} parent=1 // pred_check
      _
    $region49: #{tpu_custom_call.1} parent=1 // pred_check_branch
      %385 = sbr.rel (0) target = $region51
    $region50: #{tpu_custom_call.1} parent=1 // pred_region
      %387 = dma.done [#allocation11], 128
    $region51: #{tpu_custom_call.1} parent=1 // pred_fallthru
      _
    %388 = vsyncpa [#allocation7], 1
    %389 = vsyncpa [#allocation8], 1
    %390 = vsyncpa [#allocation11], 1

</llo_original>
